<compile_context>
chip_gen: v5e
topology: v5e:2x2
jax: 0.10.0
libtpu: 0.0.40
codegen_flags: <defaults>
</compile_context>

<pallas_src>
import jax
import jax.numpy as jnp
from jax.experimental import pallas as pl
from jax.experimental.pallas import tpu as pltpu

_LANES = 128
_SUBLANES = 8


def _cdiv(a, b):
    return -(-a // b)


def _round_up(a, b):
    return _cdiv(a, b) * b


def _chip_config():
    """Best-effort, trace-time chip-generation detection.

    Returns (num_parallel, max_tile_rows, vmem_limit_bytes).
    """
    kind = ""
    try:
        kind = jax.devices()[0].device_kind.lower()
    except Exception:
        pass
    if "v7" in kind:
        # 2 TensorCores / chip, 64 MiB VMEM, ~3.2 TB/s HBM: larger tiles and a
        # 2-way parallel outer axis; keep the VMEM limit below physical 64 MiB
        # to leave room for the compiler's f32 elementwise temporaries.
        # TODO(synk): verify on xprof that both TCs engage; if not, switch the
        # outer axis to pltpu.CORE_PARALLEL semantics.
        return 2, 8192, 48 << 20
    # v5e / v6e: single TensorCore, 128 MiB physical VMEM.
    return 1, 4096, 48 << 20


def _dice_kernel(n_ref, x_ref, t_ref, out_ref):
    """Accumulate partial sums of sigmoid(x)*t, sigmoid(x), t.

    n_ref   : (1,) SMEM int32 - number of valid (unpadded) elements
    x_ref   : (T, 128) VMEM input tile (original dtype)
    t_ref   : (T, 128) VMEM target tile (original dtype)
    out_ref : (1, 3, 8, 128) VMEM partial-sum block, resident across the inner
              ('arbitrary') grid axis and indexed by the outer ('parallel') axis.
    """
    c = pl.program_id(0)            # parallel (core) axis
    i = pl.program_id(1)            # reduction axis

    @pl.when(i == 0)
    def _():
        out_ref[...] = jnp.zeros_like(out_ref)

    x = x_ref[...].astype(jnp.float32)
    t = t_ref[...].astype(jnp.float32)
    # Exact sigmoid (keeps us well inside the 1e-5 tolerance); the EUP
    # exp + approx-reciprocal variant is only worth it if VALU binds on v7x.
    s = jax.nn.sigmoid(x)

    tile_rows = x.shape[0]
    tile_elems = tile_rows * _LANES
    groups = tile_rows // _SUBLANES

    # Logical flat offset of this tile.  int32: valid for n < 2^31 elements.
    # TODO(synk): split into (tile_idx, remainder) SMEM scalars for >2.1e9 elems.
    base = (c * pl.num_programs(1) + i) * tile_elems
    n_valid = n_ref[0]

    def _accumulate(s_v, t_v):
        # Fold (T,128) -> (8,128): vreg-aligned reshape + leading-axis sums are
        # pure VPU adds (no per-step cross-lane XLU work).
        st = (s_v * t_v).reshape(groups, _SUBLANES, _LANES).sum(axis=0)
        ss = s_v.reshape(groups, _SUBLANES, _LANES).sum(axis=0)
        tt = t_v.reshape(groups, _SUBLANES, _LANES).sum(axis=0)
        out_ref[0, 0] += st   # intersection partial
        out_ref[0, 1] += ss   # sum(sigmoid(x)) partial
        out_ref[0, 2] += tt   # sum(t) partial

    # Fast path: every element of this tile is valid -> no mask work.
    @pl.when(base + tile_elems <= n_valid)
    def _():
        _accumulate(s, t)

    # Slow path: tile straddles (or lies past) n -> mask by global flat index.
    # jnp.where is a select, so any garbage/NaN read in the partial-block tail
    # (or in clamped duplicate tiles) is safely zeroed before accumulation.
    @pl.when(base + tile_elems > n_valid)
    def _():
        row = jax.lax.broadcasted_iota(jnp.int32, s.shape, 0)
        lane = jax.lax.broadcasted_iota(jnp.int32, s.shape, 1)
        flat = base + row * _LANES + lane
        valid = flat < n_valid
        _accumulate(jnp.where(valid, s, 0.0), jnp.where(valid, t, 0.0))


def dice_loss(inputs, targets, smooth=1.0):
    """Pallas TPU implementation of the PyTorch DiceLoss.forward."""
    num_parallel, max_tile_rows, vmem_limit = _chip_config()

    x = jnp.ravel(inputs)
    t = jnp.ravel(targets)
    n = x.shape[0]

    # Free reshape (no pad, no copy) whenever n is lane-aligned and at least
    # one (8,128) tile; otherwise pad minimally to the next 128-lane boundary
    # (>= 1024 elements).  The kernel masks the padded / out-of-range tail via
    # the scalar-prefetched element count, so pad values never contribute.
    min_elems = _SUBLANES * _LANES
    if n % _LANES == 0 and n >= min_elems:
        padded_n = n
    else:
        padded_n = max(_round_up(n, _LANES), min_elems)
        x = jnp.pad(x, (0, padded_n - n))
        t = jnp.pad(t, (0, padded_n - n))

    rows = padded_n // _LANES                       # >= 8
    tile_rows = min(max_tile_rows, (rows // _SUBLANES) * _SUBLANES)
    tiles_total = _cdiv(rows, tile_rows)            # last tile may be ragged
    num_parallel = min(num_parallel, tiles_total)
    tiles_per_core = _cdiv(tiles_total, num_parallel)

    x2 = x.reshape(rows, _LANES)
    t2 = t.reshape(rows, _LANES)
    n_arr = jnp.array([n], dtype=jnp.int32)

    def in_index_map(c, i, n_s):
        # Clamp so a fully out-of-range (c, i) never maps past the array; the
        # kernel's mask (computed from the *logical* grid position) zeroes any
        # re-read data from clamped duplicate tiles.
        return (jnp.minimum(c * tiles_per_core + i, tiles_total - 1), 0)

    bytes_accessed = (
        x2.size * x2.dtype.itemsize
        + t2.size * t2.dtype.itemsize
        + num_parallel * 3 * _SUBLANES * _LANES * 4
    )

    partials = pl.pallas_call(
        _dice_kernel,
        out_shape=jax.ShapeDtypeStruct(
            (num_parallel, 3, _SUBLANES, _LANES), jnp.float32
        ),
        grid_spec=pltpu.PrefetchScalarGridSpec(
            num_scalar_prefetch=1,
            grid=(num_parallel, tiles_per_core),
            in_specs=[
                pl.BlockSpec((tile_rows, _LANES), in_index_map),
                pl.BlockSpec((tile_rows, _LANES), in_index_map),
            ],
            out_specs=pl.BlockSpec(
                (1, 3, _SUBLANES, _LANES), lambda c, i, n_s: (c, 0, 0, 0)
            ),
        ),
        compiler_params=pltpu.CompilerParams(
            dimension_semantics=("parallel", "arbitrary"),
            vmem_limit_bytes=vmem_limit,
        ),
        cost_estimate=pl.CostEstimate(
            flops=6 * n, transcendentals=n, bytes_accessed=bytes_accessed
        ),
    )(n_arr, x2, t2)

    # Single cheap final reduction (tiny array) + the smoothed ratio, in JAX.
    inter = jnp.sum(partials[:, 0])
    s_sum = jnp.sum(partials[:, 1])
    t_sum = jnp.sum(partials[:, 2])
    smooth = jnp.float32(smooth)
    dice = (2.0 * inter + smooth) / (s_sum + t_sum + smooth)
    return 1.0 - dice


def dice_loss_ref(inputs, targets, smooth=1.0):
    """Pure-JAX reference mirroring the PyTorch forward."""
    s = jax.nn.sigmoid(inputs.astype(jnp.float32)).ravel()
    t = targets.astype(jnp.float32).ravel()
    inter = jnp.sum(s * t)
    dice = (2.0 * inter + smooth) / (jnp.sum(s) + jnp.sum(t) + smooth)
    return 1.0 - dice


if __name__ == "__main__":
    key = jax.random.PRNGKey(0)
    k1, k2, k3, k4 = jax.random.split(key, 4)

    # NCHW, same convention as the PyTorch module's conv-style inputs.
    B, C, H, W = 2, 4, 16, 16
    inputs = jax.random.normal(k1, (B, C, H, W), dtype=jnp.float32)
    targets = (jax.random.uniform(k2, (B, C, H, W)) > 0.5).astype(jnp.float32)

    loss = dice_loss(inputs, targets, smooth=1.0)
    loss = jax.block_until_ready(loss)
    ref = dice_loss_ref(inputs, targets, smooth=1.0)
    assert jnp.allclose(loss, ref, atol=1e-5, rtol=1e-5), (loss, ref)

    # Ragged, non-lane-aligned size exercises the masked (pad) path too.
    inputs2 = jax.random.normal(k3, (3, 5, 7, 2), dtype=jnp.float32)
    targets2 = (jax.random.uniform(k4, (3, 5, 7, 2)) > 0.5).astype(jnp.float32)
    loss2 = jax.block_until_ready(dice_loss(inputs2, targets2, smooth=1.0))
    ref2 = dice_loss_ref(inputs2, targets2, smooth=1.0)
    assert jnp.allclose(loss2, ref2, atol=1e-5, rtol=1e-5), (loss2, ref2)

    print("KERNEL_OK")
</pallas_src>

<mosaic_0001>
module attributes {stable_mosaic.version = 11 : i64} {
  func.func @_dice_kernel(%arg0: i32, %arg1: i32, %arg2: memref<1xi32, #tpu.memory_space<smem>>, %arg3: memref<16x128xf32, #tpu.memory_space<vmem>>, %arg4: memref<16x128xf32, #tpu.memory_space<vmem>>, %arg5: memref<1x3x8x128xf32, #tpu.memory_space<vmem>>) attributes {dimension_semantics = [#tpu.dimension_semantics<parallel>, #tpu.dimension_semantics<arbitrary>], iteration_bounds = array<i64: 1, 1>, scalar_prefetch = 1 : i64, scratch_operands = 0 : i64, tpu.core_type = #tpu.core_type<tc>, window_params = [{transform_indices = @transform_0, window_bounds = array<i64: 16, 128>}, {transform_indices = @transform_1, window_bounds = array<i64: 16, 128>}, {transform_indices = @transform_2, window_bounds = array<i64: 1, 3, 8, 128>}]} {
    %c0_i32 = arith.constant 0 : i32
    %0 = arith.cmpi eq, %arg1, %c0_i32 : i32
    %1 = arith.extui %0 : i1 to i32
    %c0_i32_0 = arith.constant 0 : i32
    %2 = arith.cmpi ne, %1, %c0_i32_0 : i32
    scf.if %2 {
      %cst_9 = arith.constant 0.000000e+00 : f32
      %22 = vector.broadcast %cst_9 : f32 to vector<1x3x8x128xf32>
      %c0_10 = arith.constant 0 : index
      %c0_11 = arith.constant 0 : index
      %c0_12 = arith.constant 0 : index
      %c0_13 = arith.constant 0 : index
      %23 = vector.load %arg5[%c0_10, %c0_11, %c0_12, %c0_13] : memref<1x3x8x128xf32, #tpu.memory_space<vmem>>, vector<1x3x8x128xf32>
      tpu.vector_store %arg5[%c0_10, %c0_11, %c0_12, %c0_13], %22 {strides = array<i32>} : memref<1x3x8x128xf32, #tpu.memory_space<vmem>>, vector<1x3x8x128xf32>,
    } else {
    }
    %c0 = arith.constant 0 : index
    %c0_1 = arith.constant 0 : index
    %3 = vector.load %arg3[%c0, %c0_1] : memref<16x128xf32, #tpu.memory_space<vmem>>, vector<16x128xf32>
    %c0_2 = arith.constant 0 : index
    %c0_3 = arith.constant 0 : index
    %4 = vector.load %arg4[%c0_2, %c0_3] : memref<16x128xf32, #tpu.memory_space<vmem>>, vector<16x128xf32>
    %5 = arith.negf %3 : vector<16x128xf32>
    %6 = math.exp %5 : vector<16x128xf32>
    %cst = arith.constant 1.000000e+00 : f32
    %7 = vector.broadcast %cst : f32 to vector<16x128xf32>
    %8 = arith.addf %7, %6 : vector<16x128xf32>
    %9 = arith.divf %7, %8 : vector<16x128xf32>
    %c1_i32 = arith.constant 1 : i32
    %10 = arith.muli %arg0, %c1_i32 : i32
    %11 = arith.addi %10, %arg1 : i32
    %c2048_i32 = arith.constant 2048 : i32
    %12 = arith.muli %11, %c2048_i32 : i32
    %c0_4 = arith.constant 0 : index
    %13 = memref.load %arg2[%c0_4] : memref<1xi32, #tpu.memory_space<smem>>
    %c2048_i32_5 = arith.constant 2048 : i32
    %14 = arith.addi %12, %c2048_i32_5 : i32
    %15 = arith.cmpi sle, %14, %13 : i32
    %16 = arith.extui %15 : i1 to i32
    %c0_i32_6 = arith.constant 0 : i32
    %17 = arith.cmpi ne, %16, %c0_i32_6 : i32
    scf.if %17 {
      %22 = arith.mulf %9, %4 : vector<16x128xf32>
      %23 = vector.shape_cast %22 : vector<16x128xf32> to vector<2x8x128xf32>
      %cst_9 = arith.constant dense<0.000000e+00> : vector<8x128xf32>
      %24 = vector.multi_reduction <add>, %23, %cst_9 [0] : vector<2x8x128xf32> to vector<8x128xf32>
      %25 = vector.shape_cast %9 : vector<16x128xf32> to vector<2x8x128xf32>
      %cst_10 = arith.constant dense<0.000000e+00> : vector<8x128xf32>
      %26 = vector.multi_reduction <add>, %25, %cst_10 [0] : vector<2x8x128xf32> to vector<8x128xf32>
      %27 = vector.shape_cast %4 : vector<16x128xf32> to vector<2x8x128xf32>
      %cst_11 = arith.constant dense<0.000000e+00> : vector<8x128xf32>
      %28 = vector.multi_reduction <add>, %27, %cst_11 [0] : vector<2x8x128xf32> to vector<8x128xf32>
      %c0_12 = arith.constant 0 : index
      %c0_13 = arith.constant 0 : index
      %c0_14 = arith.constant 0 : index
      %c0_15 = arith.constant 0 : index
      %29 = vector.load %arg5[%c0_12, %c0_13, %c0_14, %c0_15] : memref<1x3x8x128xf32, #tpu.memory_space<vmem>>, vector<1x1x8x128xf32>
      %30 = vector.shape_cast %29 : vector<1x1x8x128xf32> to vector<8x128xf32>
      %31 = arith.addf %30, %24 : vector<8x128xf32>
      %c0_16 = arith.constant 0 : index
      %c0_17 = arith.constant 0 : index
      %c0_18 = arith.constant 0 : index
      %c0_19 = arith.constant 0 : index
      %32 = vector.load %arg5[%c0_16, %c0_17, %c0_18, %c0_19] : memref<1x3x8x128xf32, #tpu.memory_space<vmem>>, vector<1x1x8x128xf32>
      %33 = vector.shape_cast %32 : vector<1x1x8x128xf32> to vector<8x128xf32>
      %34 = vector.shape_cast %31 : vector<8x128xf32> to vector<1x1x8x128xf32>
      tpu.vector_store %arg5[%c0_16, %c0_17, %c0_18, %c0_19], %34 {strides = array<i32>} : memref<1x3x8x128xf32, #tpu.memory_space<vmem>>, vector<1x1x8x128xf32>,
      %c0_20 = arith.constant 0 : index
      %c1 = arith.constant 1 : index
      %c0_21 = arith.constant 0 : index
      %c0_22 = arith.constant 0 : index
      %35 = vector.load %arg5[%c0_20, %c1, %c0_21, %c0_22] : memref<1x3x8x128xf32, #tpu.memory_space<vmem>>, vector<1x1x8x128xf32>
      %36 = vector.shape_cast %35 : vector<1x1x8x128xf32> to vector<8x128xf32>
      %37 = arith.addf %36, %26 : vector<8x128xf32>
      %c0_23 = arith.constant 0 : index
      %c1_24 = arith.constant 1 : index
      %c0_25 = arith.constant 0 : index
      %c0_26 = arith.constant 0 : index
      %38 = vector.load %arg5[%c0_23, %c1_24, %c0_25, %c0_26] : memref<1x3x8x128xf32, #tpu.memory_space<vmem>>, vector<1x1x8x128xf32>
      %39 = vector.shape_cast %38 : vector<1x1x8x128xf32> to vector<8x128xf32>
      %40 = vector.shape_cast %37 : vector<8x128xf32> to vector<1x1x8x128xf32>
      tpu.vector_store %arg5[%c0_23, %c1_24, %c0_25, %c0_26], %40 {strides = array<i32>} : memref<1x3x8x128xf32, #tpu.memory_space<vmem>>, vector<1x1x8x128xf32>,
      %c0_27 = arith.constant 0 : index
      %c2 = arith.constant 2 : index
      %c0_28 = arith.constant 0 : index
      %c0_29 = arith.constant 0 : index
      %41 = vector.load %arg5[%c0_27, %c2, %c0_28, %c0_29] : memref<1x3x8x128xf32, #tpu.memory_space<vmem>>, vector<1x1x8x128xf32>
      %42 = vector.shape_cast %41 : vector<1x1x8x128xf32> to vector<8x128xf32>
      %43 = arith.addf %42, %28 : vector<8x128xf32>
      %c0_30 = arith.constant 0 : index
      %c2_31 = arith.constant 2 : index
      %c0_32 = arith.constant 0 : index
      %c0_33 = arith.constant 0 : index
      %44 = vector.load %arg5[%c0_30, %c2_31, %c0_32, %c0_33] : memref<1x3x8x128xf32, #tpu.memory_space<vmem>>, vector<1x1x8x128xf32>
      %45 = vector.shape_cast %44 : vector<1x1x8x128xf32> to vector<8x128xf32>
      %46 = vector.shape_cast %43 : vector<8x128xf32> to vector<1x1x8x128xf32>
      tpu.vector_store %arg5[%c0_30, %c2_31, %c0_32, %c0_33], %46 {strides = array<i32>} : memref<1x3x8x128xf32, #tpu.memory_space<vmem>>, vector<1x1x8x128xf32>,
    } else {
    }
    %c2048_i32_7 = arith.constant 2048 : i32
    %18 = arith.addi %12, %c2048_i32_7 : i32
    %19 = arith.cmpi sgt, %18, %13 : i32
    %20 = arith.extui %19 : i1 to i32
    %c0_i32_8 = arith.constant 0 : i32
    %21 = arith.cmpi ne, %20, %c0_i32_8 : i32
    scf.if %21 {
      %22 = tpu.iota {dimensions = array<i32: 0>} : vector<16x128xi32>
      %23 = tpu.iota {dimensions = array<i32: 1>} : vector<16x128xi32>
      %c128_i32 = arith.constant 128 : i32
      %24 = vector.broadcast %c128_i32 : i32 to vector<16x128xi32>
      %25 = arith.muli %22, %24 : vector<16x128xi32>
      %26 = vector.broadcast %12 : i32 to vector<16x128xi32>
      %27 = arith.addi %26, %25 : vector<16x128xi32>
      %28 = arith.addi %27, %23 : vector<16x128xi32>
      %29 = vector.broadcast %13 : i32 to vector<16x128xi32>
      %30 = arith.cmpi slt, %28, %29 : vector<16x128xi32>
      %cst_9 = arith.constant 0.000000e+00 : f32
      %31 = vector.broadcast %cst_9 : f32 to vector<16x128xf32>
      %32 = arith.select %30, %9, %31 : vector<16x128xi1>, vector<16x128xf32>
      %cst_10 = arith.constant 0.000000e+00 : f32
      %33 = vector.broadcast %cst_10 : f32 to vector<16x128xf32>
      %34 = arith.select %30, %4, %33 : vector<16x128xi1>, vector<16x128xf32>
      %35 = arith.mulf %32, %34 : vector<16x128xf32>
      %36 = vector.shape_cast %35 : vector<16x128xf32> to vector<2x8x128xf32>
      %cst_11 = arith.constant dense<0.000000e+00> : vector<8x128xf32>
      %37 = vector.multi_reduction <add>, %36, %cst_11 [0] : vector<2x8x128xf32> to vector<8x128xf32>
      %38 = vector.shape_cast %32 : vector<16x128xf32> to vector<2x8x128xf32>
      %cst_12 = arith.constant dense<0.000000e+00> : vector<8x128xf32>
      %39 = vector.multi_reduction <add>, %38, %cst_12 [0] : vector<2x8x128xf32> to vector<8x128xf32>
      %40 = vector.shape_cast %34 : vector<16x128xf32> to vector<2x8x128xf32>
      %cst_13 = arith.constant dense<0.000000e+00> : vector<8x128xf32>
      %41 = vector.multi_reduction <add>, %40, %cst_13 [0] : vector<2x8x128xf32> to vector<8x128xf32>
      %c0_14 = arith.constant 0 : index
      %c0_15 = arith.constant 0 : index
      %c0_16 = arith.constant 0 : index
      %c0_17 = arith.constant 0 : index
      %42 = vector.load %arg5[%c0_14, %c0_15, %c0_16, %c0_17] : memref<1x3x8x128xf32, #tpu.memory_space<vmem>>, vector<1x1x8x128xf32>
      %43 = vector.shape_cast %42 : vector<1x1x8x128xf32> to vector<8x128xf32>
      %44 = arith.addf %43, %37 : vector<8x128xf32>
      %c0_18 = arith.constant 0 : index
      %c0_19 = arith.constant 0 : index
      %c0_20 = arith.constant 0 : index
      %c0_21 = arith.constant 0 : index
      %45 = vector.load %arg5[%c0_18, %c0_19, %c0_20, %c0_21] : memref<1x3x8x128xf32, #tpu.memory_space<vmem>>, vector<1x1x8x128xf32>
      %46 = vector.shape_cast %45 : vector<1x1x8x128xf32> to vector<8x128xf32>
      %47 = vector.shape_cast %44 : vector<8x128xf32> to vector<1x1x8x128xf32>
      tpu.vector_store %arg5[%c0_18, %c0_19, %c0_20, %c0_21], %47 {strides = array<i32>} : memref<1x3x8x128xf32, #tpu.memory_space<vmem>>, vector<1x1x8x128xf32>,
      %c0_22 = arith.constant 0 : index
      %c1 = arith.constant 1 : index
      %c0_23 = arith.constant 0 : index
      %c0_24 = arith.constant 0 : index
      %48 = vector.load %arg5[%c0_22, %c1, %c0_23, %c0_24] : memref<1x3x8x128xf32, #tpu.memory_space<vmem>>, vector<1x1x8x128xf32>
      %49 = vector.shape_cast %48 : vector<1x1x8x128xf32> to vector<8x128xf32>
      %50 = arith.addf %49, %39 : vector<8x128xf32>
      %c0_25 = arith.constant 0 : index
      %c1_26 = arith.constant 1 : index
      %c0_27 = arith.constant 0 : index
      %c0_28 = arith.constant 0 : index
      %51 = vector.load %arg5[%c0_25, %c1_26, %c0_27, %c0_28] : memref<1x3x8x128xf32, #tpu.memory_space<vmem>>, vector<1x1x8x128xf32>
      %52 = vector.shape_cast %51 : vector<1x1x8x128xf32> to vector<8x128xf32>
      %53 = vector.shape_cast %50 : vector<8x128xf32> to vector<1x1x8x128xf32>
      tpu.vector_store %arg5[%c0_25, %c1_26, %c0_27, %c0_28], %53 {strides = array<i32>} : memref<1x3x8x128xf32, #tpu.memory_space<vmem>>, vector<1x1x8x128xf32>,
      %c0_29 = arith.constant 0 : index
      %c2 = arith.constant 2 : index
      %c0_30 = arith.constant 0 : index
      %c0_31 = arith.constant 0 : index
      %54 = vector.load %arg5[%c0_29, %c2, %c0_30, %c0_31] : memref<1x3x8x128xf32, #tpu.memory_space<vmem>>, vector<1x1x8x128xf32>
      %55 = vector.shape_cast %54 : vector<1x1x8x128xf32> to vector<8x128xf32>
      %56 = arith.addf %55, %41 : vector<8x128xf32>
      %c0_32 = arith.constant 0 : index
      %c2_33 = arith.constant 2 : index
      %c0_34 = arith.constant 0 : index
      %c0_35 = arith.constant 0 : index
      %57 = vector.load %arg5[%c0_32, %c2_33, %c0_34, %c0_35] : memref<1x3x8x128xf32, #tpu.memory_space<vmem>>, vector<1x1x8x128xf32>
      %58 = vector.shape_cast %57 : vector<1x1x8x128xf32> to vector<8x128xf32>
      %59 = vector.shape_cast %56 : vector<8x128xf32> to vector<1x1x8x128xf32>
      tpu.vector_store %arg5[%c0_32, %c2_33, %c0_34, %c0_35], %59 {strides = array<i32>} : memref<1x3x8x128xf32, #tpu.memory_space<vmem>>, vector<1x1x8x128xf32>,
    } else {
    }
    return
  }
  func.func @transform_0(%arg0: i32, %arg1: i32, %arg2: memref<1xi32, #tpu.memory_space<smem>>) -> (i32, i32) {
    %c1_i32 = arith.constant 1 : i32
    %0 = arith.muli %arg0, %c1_i32 : i32
    %1 = arith.addi %0, %arg1 : i32
    %c0_i32 = arith.constant 0 : i32
    %2 = arith.minsi %1, %c0_i32 : i32
    %c0_i32_0 = arith.constant 0 : i32
    %c0_i32_1 = arith.constant 0 : i32
    return %2, %c0_i32_0 : i32, i32
  }
  func.func @transform_1(%arg0: i32, %arg1: i32, %arg2: memref<1xi32, #tpu.memory_space<smem>>) -> (i32, i32) {
    %c1_i32 = arith.constant 1 : i32
    %0 = arith.muli %arg0, %c1_i32 : i32
    %1 = arith.addi %0, %arg1 : i32
    %c0_i32 = arith.constant 0 : i32
    %2 = arith.minsi %1, %c0_i32 : i32
    %c0_i32_0 = arith.constant 0 : i32
    %c0_i32_1 = arith.constant 0 : i32
    return %2, %c0_i32_0 : i32, i32
  }
  func.func @transform_2(%arg0: i32, %arg1: i32, %arg2: memref<1xi32, #tpu.memory_space<smem>>) -> (i32, i32, i32, i32) {
    %c0_i32 = arith.constant 0 : i32
    %c0_i32_0 = arith.constant 0 : i32
    %c0_i32_1 = arith.constant 0 : i32
    %c0_i32_2 = arith.constant 0 : i32
    return %arg0, %c0_i32, %c0_i32_0, %c0_i32_1 : i32, i32, i32, i32
  }
}

</mosaic_0001>

<llo_original>
// kernel: tpu_custom_call.1
$region0: #{tpu_custom_call.1}
  #allocation0 [shape = 'u32[]', space=smem, size = 0x4, offset = 0x4, fixed_abs, tag = 'smem constant byte address 0x4 - core index']
  #allocation1 [shape = 'u32[72,128]{1,0:T(1,128)}', space=vmem, size = 0x9000, scoped, tag = 'internal scratch']
  #allocation2 [shape = 's32[1]{0}', space=sflag, size = 0x4, scoped, tag = 'scoped memory for tpu_custom_call.1']
  #allocation3 [shape = 's32[1]{0:T(128)S(6)}', space=smem, size = 0x200, scoped, tag = 'prefetched SMEM operand 0']
  %s0 = inlined_call_operand.<no memory space> [shape: s32[1], index: 0, kind: input, shape index: {}]
  %s1 = inlined_call_operand.hbm [shape: f32[16,128], index: 1, kind: input, shape index: {}]
  %s2 = inlined_call_operand.hbm [shape: f32[16,128], index: 2, kind: input, shape index: {}]
  %s3 = inlined_call_operand.hbm [shape: f32[1,3,8,128], index: 3, kind: output, shape index: {}]
  %s4 = sld [smem:[#allocation0]]
  $region38: #{tpu_custom_call.1} parent=0
    _
  %s6 = ssub.s32 1, %s4
  %s7 = scalar_select 0, %s6, %s4
  %8 = sst [smem:[#allocation3]] %s0
  $region1: #{tpu_custom_call.1} parent=0
    #allocation4 [shape = 'u8[8192]{0}', space=vmem, size = 0x2000, scoped, tag = 'input window, operand 1, single buffered']
    #allocation5 [shape = 's32[1]{0}', space=sflag, size = 0x4, scoped, tag = 'scoped memory for tpu_custom_call.1']
    #allocation6 [shape = 's32[1]{0}', space=sflag, size = 0x4, scoped, tag = 'scoped memory for tpu_custom_call.1']
    #allocation7 [shape = 'u8[8192]{0}', space=vmem, size = 0x2000, scoped, tag = 'input window, operand 2, single buffered']
    #allocation8 [shape = 's32[1]{0}', space=sflag, size = 0x4, scoped, tag = 'scoped memory for tpu_custom_call.1']
    #allocation9 [shape = 'u8[12288]{0}', space=vmem, size = 0x3000, scoped, tag = 'output window, operand 0, single buffered']
    %9 = vsyncpa [#allocation5], 0
    %10 = vsyncpa [#allocation8], 0
    %11 = vsyncpa [#allocation6], 0
    // Predicated region
    $region2: #{tpu_custom_call.1} parent=1 // pred_check
      _
    $region3: #{tpu_custom_call.1} parent=1 // pred_check_branch
      %13 = sbr.rel (0) target = $region5
    $region4: #{tpu_custom_call.1} parent=1 // pred_region
      %s14 = sadd.s32 0, 0
      %p15 = scmp.lt.s32.totalorder %s14, 0
      %s16 = scalar_select %p15, %s14, 0
      %s17 = smul.u32 2, %s16
      %19 = vsyncadd [#allocation5], 0
      %s20 = smul.addr %s17, 8
      %s21 = scalar_lea.hbm %s1, %s20
      %s22 = sshll.u32 %s21, 4
      %s23 = int_to_ptr.hbm [resolvable:$true] %s22
      %s24 = sshll.u32 [#allocation4], 4
      %s25 = int_to_ptr.vmem [resolvable:$true] %s24
      %30 = dma.hbm_to_vmem [thread:$0]  %s23, 256, %s25, [#allocation5], 128, 128, 8
    $region5: #{tpu_custom_call.1} parent=1 // pred_fallthru
      _
    // Predicated region
    $region6: #{tpu_custom_call.1} parent=1 // pred_check
      _
    $region7: #{tpu_custom_call.1} parent=1 // pred_check_branch
      %32 = sbr.rel (0) target = $region9
    $region8: #{tpu_custom_call.1} parent=1 // pred_region
      %s33 = sadd.s32 0, 0
      %p34 = scmp.lt.s32.totalorder %s33, 0
      %s35 = scalar_select %p34, %s33, 0
      %s36 = smul.u32 2, %s35
      %38 = vsyncadd [#allocation8], 0
      %s39 = smul.addr %s36, 8
      %s40 = scalar_lea.hbm %s2, %s39
      %s41 = sshll.u32 %s40, 4
      %s42 = int_to_ptr.hbm [resolvable:$true] %s41
      %s43 = sshll.u32 [#allocation7], 4
      %s44 = int_to_ptr.vmem [resolvable:$true] %s43
      %49 = dma.hbm_to_vmem [thread:$0]  %s42, 256, %s44, [#allocation8], 128, 128, 8
    $region9: #{tpu_custom_call.1} parent=1 // pred_fallthru
      _
    // Predicated region
    $region10: #{tpu_custom_call.1} parent=1 // pred_check
      _
    $region11: #{tpu_custom_call.1} parent=1 // pred_check_branch
      %51 = sbr.rel (0) target = $region13
    $region12: #{tpu_custom_call.1} parent=1 // pred_region
      %53 = dma.done [#allocation5], 256
    $region13: #{tpu_custom_call.1} parent=1 // pred_fallthru
      _
    // Predicated region
    $region14: #{tpu_custom_call.1} parent=1 // pred_check
      _
    $region15: #{tpu_custom_call.1} parent=1 // pred_check_branch
      %55 = sbr.rel (0) target = $region17
    $region16: #{tpu_custom_call.1} parent=1 // pred_region
      %57 = dma.done [#allocation8], 256
    $region17: #{tpu_custom_call.1} parent=1 // pred_fallthru
      _
    %s58 = sadd.s32 0, 0
    %p59 = scmp.lt.s32.totalorder %s58, 0
    %s60 = scalar_select %p59, %s58, 0
    %s61 = smul.u32 2, %s60
    %s62 = sadd.s32 0, 0
    %p63 = scmp.lt.s32.totalorder %s62, 0
    %s64 = scalar_select %p63, %s62, 0
    %s65 = smul.u32 2, %s64
    %p66 = scmp.eq.s32.totalorder 0, 0
    // Predicated region
    $region18: #{tpu_custom_call.1} parent=1 // pred_check
      %p67 = pneg %p66
    $region19: #{tpu_custom_call.1} parent=1 // pred_check_branch
      %69 = sbr.rel (%p67) target = $region21
    $region20: #{tpu_custom_call.1} parent=1 // pred_region
      %70 = vst [vmem:[#allocation9] sm:$0xff] 0.0
      %71 = vst [vmem:[#allocation9 + $0x8] sm:$0xff] 0.0
      %72 = vst [vmem:[#allocation9 + $0x10] sm:$0xff] 0.0
    $region21: #{tpu_custom_call.1} parent=1 // pred_fallthru
      _
    %v73 = vld [vmem:[#allocation4] sm:$0xff]
    %v74 = vld [vmem:[#allocation4 + $0x8] sm:$0xff]
    %v75 = vld [vmem:[#allocation7] sm:$0xff]
    %v76 = vld [vmem:[#allocation7 + $0x8] sm:$0xff]
    %v77 = vxor.u32 %v73, 2147483648
    %v78 = vxor.u32 %v74, 2147483648
    %v79 = vmul.f32 %v77, 1.442695
    %v80 = vpow.pop %v79
    %v81 = vmul.f32 %v78, 1.442695
    %v82 = vpow.pop %v81
    %v83 = vadd.f32 %v80, 1.0
    %v84 = vadd.f32 %v82, 1.0
    %v85 = vrcp.pop %v83
    %v86 = vmul.f32 %v83, %v85
    %v87 = vsub.f32 1.0, %v86
    %v88 = vmul.f32 %v85, %v87
    %v89 = vadd.f32 %v85, %v88
    %vm90 = vweird.f32 %v83
    %vm91 = vweird.f32 %v85
    %vm92 = vmor %vm90, %vm91
    %v93 = vsel %vm92, %v85, %v89
    %v94 = vand.u32 2147483647, %v83
    %vm95 = vcmp.eq.f32.partialorder %v94, 8.507059e+37
    %v96 = vand.u32 %v83, 2147483648
    %v97 = vor.u32 1.1754944e-38, %v96
    %v98 = vsel %vm95, %v97, %v93
    %v99 = vmul.f32 1.0, %v98
    %v100 = vrcp.pop %v84
    %v101 = vmul.f32 %v84, %v100
    %v102 = vsub.f32 1.0, %v101
    %v103 = vmul.f32 %v100, %v102
    %v104 = vadd.f32 %v100, %v103
    %vm105 = vweird.f32 %v84
    %vm106 = vweird.f32 %v100
    %vm107 = vmor %vm105, %vm106
    %v108 = vsel %vm107, %v100, %v104
    %v109 = vand.u32 2147483647, %v84
    %vm110 = vcmp.eq.f32.partialorder %v109, 8.507059e+37
    %v111 = vand.u32 %v84, 2147483648
    %v112 = vor.u32 1.1754944e-38, %v111
    %v113 = vsel %vm110, %v112, %v108
    %v114 = vmul.f32 1.0, %v113
    %s115 = sadd.s32 0, 0
    %s116 = smul.u32 %s115, 2048
    %s117 = sld [smem:[#allocation3]]
    %s118 = sadd.s32 %s116, 2048
    %p119 = scmp.le.s32.totalorder %s118, %s117
    // Predicated region
    $region22: #{tpu_custom_call.1} parent=1 // pred_check
      %p120 = pneg %p119
    $region23: #{tpu_custom_call.1} parent=1 // pred_check_branch
      %122 = sbr.rel (%p120) target = $region25
    $region24: #{tpu_custom_call.1} parent=1 // pred_region
      %v123 = vmul.f32 %v99, %v75
      %v124 = vmul.f32 %v114, %v76
      %v125 = vadd.f32 %v123, %v124
      %v126 = vadd.f32 %v99, %v114
      %v127 = vadd.f32 %v75, %v76
      %v128 = vld [vmem:[#allocation9] sm:$0xff]
      %v129 = vadd.f32 %v128, %v125
      %130 = vst [vmem:[#allocation9] sm:$0xff] %v129
      %s131 = scalar_lea.vmem [#allocation9], 8
      %v132 = vld [vmem:[%s131] sm:$0xff]
      %v133 = vadd.f32 %v132, %v126
      %134 = vst [vmem:[%s131] sm:$0xff] %v133
      %s135 = scalar_lea.vmem [#allocation9], 16
      %v136 = vld [vmem:[%s135] sm:$0xff]
      %v137 = vadd.f32 %v136, %v127
      %138 = vst [vmem:[%s135] sm:$0xff] %v137
    $region25: #{tpu_custom_call.1} parent=1 // pred_fallthru
      _
    %p139 = scmp.gt.s32.totalorder %s118, %s117
    // Predicated region
    $region26: #{tpu_custom_call.1} parent=1 // pred_check
      %p140 = pneg %p139
    $region27: #{tpu_custom_call.1} parent=1 // pred_check_branch
      %142 = sbr.rel (%p140) target = $region29
    $region28: #{tpu_custom_call.1} parent=1 // pred_region
      %v143 = vlaneseq
      %v144 = vshrl.u32 %v143, 7
      %v145 = vadd.s32 %v144, 8
      %v146 = vlaneseq
      %v147 = vand.u32 %v146, 127
      %v148 = vmul.u32 %v144, 128
      %v149 = vmul.u32 %v145, 128
      %v150 = vstv %s116
      %v151 = vadd.s32 %v150, %v148
      %v152 = vadd.s32 %v150, %v149
      %v153 = vadd.s32 %v151, %v147
      %v154 = vadd.s32 %v152, %v147
      %v155 = vstv %s117
      %vm156 = vcmp.lt.s32.totalorder %v153, %v155
      %vm157 = vcmp.lt.s32.totalorder %v154, %v155
      %v158 = vsel %vm156, %v99, 0.0
      %v159 = vsel %vm157, %v114, 0.0
      %v160 = vsel %vm156, %v75, 0.0
      %v161 = vsel %vm157, %v76, 0.0
      %v162 = vmul.f32 %v158, %v160
      %v163 = vmul.f32 %v159, %v161
      %v164 = vadd.f32 %v162, %v163
      %v165 = vadd.f32 %v158, %v159
      %v166 = vadd.f32 %v160, %v161
      %v167 = vld [vmem:[#allocation9] sm:$0xff]
      %v168 = vadd.f32 %v167, %v164
      %169 = vst [vmem:[#allocation9] sm:$0xff] %v168
      %s170 = scalar_lea.vmem [#allocation9], 8
      %v171 = vld [vmem:[%s170] sm:$0xff]
      %v172 = vadd.f32 %v171, %v165
      %173 = vst [vmem:[%s170] sm:$0xff] %v172
      %s174 = scalar_lea.vmem [#allocation9], 16
      %v175 = vld [vmem:[%s174] sm:$0xff]
      %v176 = vadd.f32 %v175, %v166
      %177 = vst [vmem:[%s174] sm:$0xff] %v176
    $region29: #{tpu_custom_call.1} parent=1 // pred_fallthru
      _
    // Predicated region
    $region30: #{tpu_custom_call.1} parent=1 // pred_check
      _
    $region31: #{tpu_custom_call.1} parent=1 // pred_check_branch
      %179 = sbr.rel (0) target = $region33
    $region32: #{tpu_custom_call.1} parent=1 // pred_region
      %181 = vsyncadd [#allocation6], 0
      %s182 = sshll.u32 [#allocation9], 4
      %s183 = int_to_ptr.vmem [resolvable:$true] %s182
      %s184 = sshll.u32 %s3, 4
      %s185 = int_to_ptr.hbm [resolvable:$true] %s184
      %190 = dma.vmem_to_hbm [thread:$0]  %s183, 384, %s185, [#allocation6], 128, 128, 8
    $region33: #{tpu_custom_call.1} parent=1 // pred_fallthru
      _
    // Predicated region
    $region34: #{tpu_custom_call.1} parent=1 // pred_check
      _
    $region35: #{tpu_custom_call.1} parent=1 // pred_check_branch
      %192 = sbr.rel (0) target = $region37
    $region36: #{tpu_custom_call.1} parent=1 // pred_region
      %194 = dma.done [#allocation6], 384
    $region37: #{tpu_custom_call.1} parent=1 // pred_fallthru
      _
    %195 = vsyncpa [#allocation5], 1
    %196 = vsyncpa [#allocation8], 1
    %197 = vsyncpa [#allocation6], 1

</llo_original>
